<compile_context>
chip_gen: v5e
topology: v5e:2x2
jax: 0.10.0
libtpu: 0.0.40
codegen_flags: <defaults>
</compile_context>

<pallas_src>
import functools

import jax
import jax.numpy as jnp
from jax.experimental import pallas as pl
from jax.experimental.pallas import tpu as pltpu


def _round_up(x, m):
    return (x + m - 1) // m * m


def _vmem_capacity_bytes():
    """Per-TensorCore physical VMEM (generation-aware tiling); conservative fallback."""
    try:
        return int(pltpu.get_tpu_info().vmem_capacity_bytes)
    except Exception:
        pass
    try:
        kind = jax.devices()[0].device_kind.lower()
        if "v5" in kind or "v6" in kind:
            return 128 << 20
    except Exception:
        pass
    return 64 << 20  # conservative (v7x-sized) default


def _focal_loss_kernel(logits_ref, target_ref, out_ref, *, gamma, n_valid, needs_mask):
    # logits_ref: (TILE_N, C), target_ref: (TILE_N, 1) int32,
    # out_ref: (1, 8, 128) f32 per-tile partial-sum block (scalar broadcast).
    i = pl.program_id(0)

    x = logits_ref[...].astype(jnp.float32)            # (TILE_N, C)
    tgt = target_ref[...]                               # (TILE_N, 1) int32
    tn, c = x.shape

    # --- cross entropy (reduction='none'), numerically stable log-sum-exp ---
    m = jnp.max(x, axis=-1, keepdims=True)                               # (TILE_N, 1)
    lse = m + jnp.log(jnp.sum(jnp.exp(x - m), axis=-1, keepdims=True))   # (TILE_N, 1)

    # Gather logit at the target index with a masked select (no f32 one-hot).
    cls_idx = jax.lax.broadcasted_iota(jnp.int32, (tn, c), 1)
    tgt_logit = jnp.sum(jnp.where(cls_idx == tgt, x, 0.0),
                        axis=-1, keepdims=True)                          # (TILE_N, 1)

    ce = lse - tgt_logit                                                  # (TILE_N, 1)

    # --- focal modulation: (1 - exp(-ce))**gamma * ce ---
    if gamma == 0.0:
        focal = ce                                      # (1 - p)**0 == 1 exactly
    else:
        p = jnp.exp(-ce)
        q = jnp.maximum(1.0 - p, 0.0)                   # clamp tiny negatives
        if float(gamma).is_integer():
            w = q                                       # pure VPU multiplies
            for _ in range(int(gamma) - 1):
                w = w * q
            focal = w * ce
        else:
            focal = jnp.power(q, gamma) * ce            # general (EUP) path

    def _write(s):
        out_ref[...] = jnp.broadcast_to(s, out_ref.shape).astype(jnp.float32)

    if needs_mask:
        # Only the last grid step can hold padded rows; mask only there.
        last = pl.num_programs(0) - 1

        @pl.when(i < last)
        def _full_tile():
            _write(jnp.sum(focal))

        @pl.when(i == last)
        def _partial_tile():
            row = jax.lax.broadcasted_iota(jnp.int32, (tn, 1), 0) + i * tn
            _write(jnp.sum(jnp.where(row < n_valid, focal, 0.0)))
    else:
        _write(jnp.sum(focal))


def focal_loss_pallas(logits, targets, gamma=0.0, *, tile_n=None):
    """logits: (N, C) float array, targets: (N,) int array. Returns scalar f32."""
    n, c = logits.shape
    targets2d = targets.astype(jnp.int32).reshape(n, 1)

    vmem_cap = _vmem_capacity_bytes()
    small_vmem = vmem_cap <= (64 << 20)       # v7x-class: 64 MiB per TC

    in_bytes_per_row = max(c * logits.dtype.itemsize, 1)
    f32_bytes_per_row = c * 4
    K_TEMPS = 4  # f32 upcast, exp(x-m), iota/compare, masked select (conservative)
    per_row_cost = 2 * in_bytes_per_row + K_TEMPS * f32_bytes_per_row

    if tile_n is None:
        if small_vmem:
            work_budget = 36 << 20            # total in-flight VMEM target (v7x)
            block_cap = (7 << 20) // 2        # ~3.5 MiB logits block
        else:
            work_budget = 52 << 20            # v5e / v6e
            block_cap = 8 << 20               # ~8 MiB logits block
        tile_n = min(work_budget // per_row_cost, block_cap // in_bytes_per_row)
        tile_n = max(8, (tile_n // 8) * 8)
    tile_n = min(int(tile_n), _round_up(n, 8))
    tile_n = max(8, (tile_n // 8) * 8)

    num_tiles = pl.cdiv(n, tile_n)
    needs_mask = (n % tile_n) != 0

    # vmem limit derived from the actual tile budget, with headroom vs physical.
    est_vmem = tile_n * per_row_cost + (1 << 20)
    base_limit = (48 << 20) if small_vmem else (64 << 20)
    vmem_limit = int(min(max(base_limit, est_vmem + (4 << 20)), vmem_cap - (8 << 20)))

    cost = pl.CostEstimate(
        flops=6 * n * c,                 # VPU-ish work; this kernel has no MXU use
        transcendentals=n * c + 2 * n,   # exp(x - m), exp(-ce), log
        bytes_accessed=(n * c * logits.dtype.itemsize + n * 4
                        + num_tiles * 8 * 128 * 4),
    )

    partial = pl.pallas_call(
        functools.partial(_focal_loss_kernel, gamma=float(gamma), n_valid=n,
                          needs_mask=needs_mask),
        out_shape=jax.ShapeDtypeStruct((num_tiles, 8, 128), jnp.float32),
        grid=(num_tiles,),
        in_specs=[
            pl.BlockSpec((tile_n, c), lambda i: (i, 0)),
            pl.BlockSpec((tile_n, 1), lambda i: (i, 0)),
        ],
        out_specs=pl.BlockSpec((1, 8, 128), lambda i: (i, 0, 0)),
        compiler_params=pltpu.CompilerParams(
            dimension_semantics=("parallel",),   # per-tile partial sums, no cross-tile state
            vmem_limit_bytes=vmem_limit,
        ),
        cost_estimate=cost,
    )(logits, targets2d)

    # Final reduction over per-tile partial sums + mean over the true N.
    return jnp.sum(partial[:, 0, 0]) / n


def _focal_loss_ref(logits, targets, gamma):
    """Plain-JAX reference matching the torch module's forward semantics."""
    x = logits.astype(jnp.float32)
    lse = jax.nn.logsumexp(x, axis=-1)
    tgt_logit = jnp.take_along_axis(x, targets[:, None].astype(jnp.int32), axis=-1)[:, 0]
    ce = lse - tgt_logit
    if gamma == 0.0:
        focal = ce
    else:
        q = jnp.maximum(1.0 - jnp.exp(-ce), 0.0)
        focal = q**gamma * ce
    return jnp.mean(focal)


if __name__ == "__main__":
    key = jax.random.PRNGKey(0)
    k1, k2, k3, k4 = jax.random.split(key, 4)

    # Case 1: small (8, 16), single tile, integer / zero / fractional gamma.
    N, C = 8, 16
    logits = jax.random.normal(k1, (N, C), dtype=jnp.float32)
    targets = jax.random.randint(k2, (N,), 0, C, dtype=jnp.int32)
    for g in (2.0, 0.0, 1.5):
        loss = jax.block_until_ready(focal_loss_pallas(logits, targets, gamma=g))
        ref = _focal_loss_ref(logits, targets, g)
        assert jnp.allclose(loss, ref, rtol=1e-5, atol=1e-5), (g, loss, ref)

    # Case 2: multi-tile parallel grid with a masked partial last tile
    # (N=40, tile=16 -> 3 tiles, last has 8 valid rows).
    N2, C2 = 40, 128
    logits2 = jax.random.normal(k3, (N2, C2), dtype=jnp.float32)
    targets2 = jax.random.randint(k4, (N2,), 0, C2, dtype=jnp.int32)
    loss2 = jax.block_until_ready(
        focal_loss_pallas(logits2, targets2, gamma=2.0, tile_n=16))
    ref2 = _focal_loss_ref(logits2, targets2, 2.0)
    assert jnp.allclose(loss2, ref2, rtol=1e-5, atol=1e-5), (loss2, ref2)

    # Case 3: auto tile_n path (exercises the generation-aware heuristic).
    loss3 = jax.block_until_ready(focal_loss_pallas(logits2, targets2, gamma=2.0))
    assert jnp.allclose(loss3, ref2, rtol=1e-5, atol=1e-5), (loss3, ref2)

    print("KERNEL_OK")
</pallas_src>

<mosaic_0001>
module attributes {stable_mosaic.version = 11 : i64} {
  func.func @_focal_loss_kernel(%arg0: i32, %arg1: memref<8x16xf32, #tpu.memory_space<vmem>>, %arg2: memref<8x1xi32, #tpu.memory_space<vmem>>, %arg3: memref<1x8x128xf32, #tpu.memory_space<vmem>>) attributes {dimension_semantics = [#tpu.dimension_semantics<parallel>], iteration_bounds = array<i64: 1>, scalar_prefetch = 0 : i64, scratch_operands = 0 : i64, tpu.core_type = #tpu.core_type<tc>, window_params = [{transform_indices = @transform_0, window_bounds = array<i64: 8, 16>}, {transform_indices = @transform_1, window_bounds = array<i64: 8, 1>}, {transform_indices = @transform_2, window_bounds = array<i64: 1, 8, 128>}]} {
    %c0 = arith.constant 0 : index
    %c0_0 = arith.constant 0 : index
    %0 = vector.load %arg1[%c0, %c0_0] : memref<8x16xf32, #tpu.memory_space<vmem>>, vector<8x16xf32>
    %c0_1 = arith.constant 0 : index
    %c0_2 = arith.constant 0 : index
    %1 = vector.load %arg2[%c0_1, %c0_2] : memref<8x1xi32, #tpu.memory_space<vmem>>, vector<8x1xi32>
    %cst = arith.constant dense<0xFF800000> : vector<8xf32>
    %2 = vector.multi_reduction <maximumf>, %0, %cst [1] : vector<8x16xf32> to vector<8xf32>
    %3 = vector.shape_cast %2 : vector<8xf32> to vector<8x1xf32>
    %4 = vector.broadcast %3 : vector<8x1xf32> to vector<8x16xf32>
    %5 = arith.subf %0, %4 : vector<8x16xf32>
    %6 = math.exp %5 : vector<8x16xf32>
    %cst_3 = arith.constant dense<0.000000e+00> : vector<8xf32>
    %7 = vector.multi_reduction <add>, %6, %cst_3 [1] : vector<8x16xf32> to vector<8xf32>
    %8 = vector.shape_cast %7 : vector<8xf32> to vector<8x1xf32>
    %9 = math.log %8 : vector<8x1xf32>
    %10 = arith.addf %3, %9 : vector<8x1xf32>
    %11 = tpu.iota {dimensions = array<i32: 1>} : vector<8x16xi32>
    %12 = vector.broadcast %1 : vector<8x1xi32> to vector<8x16xi32>
    %13 = arith.cmpi eq, %11, %12 : vector<8x16xi32>
    %cst_4 = arith.constant 0.000000e+00 : f32
    %14 = vector.broadcast %cst_4 : f32 to vector<8x16xf32>
    %15 = arith.select %13, %0, %14 : vector<8x16xi1>, vector<8x16xf32>
    %cst_5 = arith.constant dense<0.000000e+00> : vector<8xf32>
    %16 = vector.multi_reduction <add>, %15, %cst_5 [1] : vector<8x16xf32> to vector<8xf32>
    %17 = vector.shape_cast %16 : vector<8xf32> to vector<8x1xf32>
    %18 = arith.subf %10, %17 : vector<8x1xf32>
    %cst_6 = arith.constant 0.000000e+00 : f32
    %19 = vector.broadcast %cst_6 : f32 to vector<8x1xf32>
    %20 = arith.subf %19, %18 : vector<8x1xf32>
    %21 = math.exp %20 : vector<8x1xf32>
    %cst_7 = arith.constant 1.000000e+00 : f32
    %22 = vector.broadcast %cst_7 : f32 to vector<8x1xf32>
    %23 = arith.subf %22, %21 : vector<8x1xf32>
    %cst_8 = arith.constant 0.000000e+00 : f32
    %24 = vector.broadcast %cst_8 : f32 to vector<8x1xf32>
    %25 = arith.maximumf %23, %24 : vector<8x1xf32>
    %26 = arith.mulf %25, %25 : vector<8x1xf32>
    %27 = arith.mulf %26, %18 : vector<8x1xf32>
    %28 = vector.shape_cast %27 : vector<8x1xf32> to vector<1x8x1xf32>
    %cst_9 = arith.constant dense<0.000000e+00> : vector<1xf32>
    %29 = vector.multi_reduction <add>, %28, %cst_9 [1, 2] : vector<1x8x1xf32> to vector<1xf32>
    %30 = vector.shape_cast %29 : vector<1xf32> to vector<1x1x1xf32>
    %31 = vector.extract %30[0, 0, 0] : f32 from vector<1x1x1xf32>
    %32 = vector.broadcast %31 : f32 to vector<1x8x128xf32>
    %c0_10 = arith.constant 0 : index
    %c0_11 = arith.constant 0 : index
    %c0_12 = arith.constant 0 : index
    %33 = vector.load %arg3[%c0_10, %c0_11, %c0_12] : memref<1x8x128xf32, #tpu.memory_space<vmem>>, vector<1x8x128xf32>
    tpu.vector_store %arg3[%c0_10, %c0_11, %c0_12], %32 {strides = array<i32>} : memref<1x8x128xf32, #tpu.memory_space<vmem>>, vector<1x8x128xf32>,
    return
  }
  func.func @transform_0(%arg0: i32) -> (i32, i32) {
    %c0_i32 = arith.constant 0 : i32
    %c0_i32_0 = arith.constant 0 : i32
    return %arg0, %c0_i32 : i32, i32
  }
  func.func @transform_1(%arg0: i32) -> (i32, i32) {
    %c0_i32 = arith.constant 0 : i32
    %c0_i32_0 = arith.constant 0 : i32
    return %arg0, %c0_i32 : i32, i32
  }
  func.func @transform_2(%arg0: i32) -> (i32, i32, i32) {
    %c0_i32 = arith.constant 0 : i32
    %c0_i32_0 = arith.constant 0 : i32
    %c0_i32_1 = arith.constant 0 : i32
    return %arg0, %c0_i32, %c0_i32_0 : i32, i32, i32
  }
}

</mosaic_0001>

<llo_original>
// kernel: tpu_custom_call.1
$region0: #{tpu_custom_call.1}
  #allocation0 [shape = 'u32[]', space=smem, size = 0x4, offset = 0x4, fixed_abs, tag = 'smem constant byte address 0x4 - core index']
  #allocation1 [shape = 'u32[72,128]{1,0:T(1,128)}', space=vmem, size = 0x9000, scoped, tag = 'internal scratch']
  %s0 = inlined_call_operand.vmem [shape: f32[8,16], index: 0, kind: input, shape index: {}]
  %s1 = inlined_call_operand.vmem [shape: s32[8,1], index: 1, kind: input, shape index: {}]
  %s2 = inlined_call_operand.hbm [shape: f32[1,8,128], index: 2, kind: output, shape index: {}]
  %s3 = sld [smem:[#allocation0]]
  $region18: #{tpu_custom_call.1} parent=0
    _
  %s5 = ssub.s32 1, %s3
  %s6 = scalar_select 0, %s5, %s3
  $region1: #{tpu_custom_call.1} parent=0
    #allocation2 [shape = 'u8[4096]{0}', space=vmem, size = 0x1000, scoped, tag = 'output window, operand 0, single buffered']
    #allocation3 [shape = 's32[1]{0}', space=sflag, size = 0x4, scoped, tag = 'scoped memory for tpu_custom_call.1']
    %7 = vsyncpa [#allocation3], 0
    // Predicated region
    $region2: #{tpu_custom_call.1} parent=1 // pred_check
      _
    $region3: #{tpu_custom_call.1} parent=1 // pred_check_branch
      %9 = sbr.rel (0) target = $region5
    $region4: #{tpu_custom_call.1} parent=1 // pred_region
      _
    $region5: #{tpu_custom_call.1} parent=1 // pred_fallthru
      _
    // Predicated region
    $region6: #{tpu_custom_call.1} parent=1 // pred_check
      _
    $region7: #{tpu_custom_call.1} parent=1 // pred_check_branch
      %11 = sbr.rel (0) target = $region9
    $region8: #{tpu_custom_call.1} parent=1 // pred_region
      _
    $region9: #{tpu_custom_call.1} parent=1 // pred_fallthru
      _
    %v12 = vld [vmem:[%s0] sm:$0xff]
    %v13 = vld [vmem:[%s1] sm:$0xff]
    %vm14 = vcmask 130048
    %v15 = vsel %vm14, %v12, -inf
    %16 = vmax.xlane.f32.xlu0 %v15
    %v17 = vpop.xlane.xlu0 %16
    %v18 = vsub.f32 %v12, %v17
    %v19 = vmul.f32 %v18, 1.442695
    %v20 = vpow.pop %v19
    %v21 = vsel %vm14, %v20, 0.0
    %22 = vadd.xlane.f32.xlu0 %v21
    %v23 = vpop.xlane.xlu0 %22
    %v24 = vlog2.pop %v23
    %v25 = vmul.f32 %v24, 0.6931472
    %v26 = vadd.f32 %v17, %v25
    %v27 = vlaneseq
    %v28 = vand.u32 %v27, 127
    %29 = vset.pattern.permute.xlu0 0
    %30 = vperm.xlu0 %29, %v13
    %v31 = vpop.permute.xlu0 %30
    %vm32 = vcmp.eq.s32.totalorder %v28, %v31
    %v33 = vsel %vm32, %v12, 0.0
    %v34 = vsel %vm14, %v33, 0.0
    %35 = vadd.xlane.f32.xlu0 %v34
    %v36 = vpop.xlane.xlu0 %35
    %v37 = vsub.f32 %v26, %v36
    %v38 = vsub.f32 0.0, %v37
    %v39 = vmul.f32 %v38, 1.442695
    %v40 = vpow.pop %v39
    %v41 = vsub.f32 1.0, %v40
    %v42 = vmax.f32 %v41, 0.0
    %v43 = vmul.f32 %v42, %v42
    %v44 = vmul.f32 %v43, %v37
    %vm45 = vcmask 7168
    %v46 = vsel %vm45, %v44, 0.0
    %47 = vadd.xlane.f32.xlu0 %v46
    %v48 = vpop.xlane.xlu0 %47
    %v49 = vrot.slane %v48, 4
    %v50 = vadd.f32 %v48, %v49
    %v51 = vrot.slane %v50, 2
    %v52 = vadd.f32 %v50, %v51
    %v53 = vrot.slane %v52, 1
    %v54 = vadd.f32 %v52, %v53
    %s55 = vtos %v54
    %v56 = vstv %s55
    %57 = vst [vmem:[#allocation2] sm:$0xff] %v56
    // Predicated region
    $region10: #{tpu_custom_call.1} parent=1 // pred_check
      _
    $region11: #{tpu_custom_call.1} parent=1 // pred_check_branch
      %59 = sbr.rel (0) target = $region13
    $region12: #{tpu_custom_call.1} parent=1 // pred_region
      %61 = vsyncadd [#allocation3], 0
      %s63 = sshll.u32 [#allocation2], 4
      %s64 = int_to_ptr.vmem [resolvable:$true] %s63
      %s65 = sshll.u32 %s2, 4
      %s66 = int_to_ptr.hbm [resolvable:$true] %s65
      %68 = dma.vmem_to_hbm [thread:$0]  %s64, 128, %s66, [#allocation3]
    $region13: #{tpu_custom_call.1} parent=1 // pred_fallthru
      _
    // Predicated region
    $region14: #{tpu_custom_call.1} parent=1 // pred_check
      _
    $region15: #{tpu_custom_call.1} parent=1 // pred_check_branch
      %70 = sbr.rel (0) target = $region17
    $region16: #{tpu_custom_call.1} parent=1 // pred_region
      %72 = dma.done [#allocation3], 128
    $region17: #{tpu_custom_call.1} parent=1 // pred_fallthru
      _
    %73 = vsyncpa [#allocation3], 1

</llo_original>
